<compile_context>
chip_gen: v7x
topology: tpu7x:2x2x1
jax: 0.10.0
libtpu: 0.0.40
codegen_flags: <defaults>
</compile_context>

<pallas_src>
import jax
import jax.numpy as jnp
from jax.experimental import pallas as pl
from jax.experimental.pallas import tpu as pltpu


_VMEM_LIMIT = 32 * 1024 * 1024  # safe scoped-VMEM request on v5e / v6e / v7x


def _compiler_params(n_grid_axes=1):
    return pltpu.CompilerParams(
        dimension_semantics=("parallel",) * n_grid_axes,
        vmem_limit_bytes=_VMEM_LIMIT)


# ----------------------------------------------------------------------------
# Pallas kernels
# ----------------------------------------------------------------------------
def _point_mlp_kernel(x_ref, w_ref, b_ref, o_ref):
    # Per-point MLP.  K (=4) is far too small for the MXU (<4% utilization on
    # every TPU generation), so do K broadcast-FMAs on the VPU instead.
    x = x_ref[...]                                   # [tm, K] f32
    w = w_ref[...]                                   # [K, N]  f32 (BN scale folded)
    tm, K = x.shape
    N = w.shape[1]
    acc = jnp.zeros((tm, N), jnp.float32)
    for k in range(K):                               # static unroll, K == 4
        acc = acc + x[:, k:k + 1] * w[k:k + 1, :]
    o_ref[...] = jnp.maximum(acc + b_ref[...], 0.0)


def _zmax_kernel(x_ref, o_ref):
    # Streaming max over the height axis on a lane-dense [Z, tg, 128] slab.
    o_ref[...] = jnp.max(x_ref[...], axis=0)


def _pad_hw_plane(x3d):
    """Zero-pad an [H, W, C] value to [H+2, W+2, C] inside the kernel."""
    H, W, C = x3d.shape
    zc = jnp.zeros((H, 1, C), x3d.dtype)
    x3d = jnp.concatenate([zc, x3d, zc], axis=1)
    zr = jnp.zeros((1, W + 2, C), x3d.dtype)
    return jnp.concatenate([zr, x3d, zr], axis=0)


def _bev_builder_kernel(bev_ref, occ_ref, wsem_ref, bsem_ref, wcom_ref, bcom_ref,
                        o_ref):
    # Fuses: semantic 1x1, completion 1x1, channel concat [occ|bev|sem|com],
    # channel pad to a lane-dense 128 and the spatial halo pad for the next 3x3
    # conv -> one HBM read of bev/occ, one lane-dense bf16 HBM write of x0.
    _, H, W, c_vw = bev_ref.shape
    Z = occ_ref.shape[-1]
    CP = o_ref.shape[-1]
    HW = H * W
    bev = bev_ref[0].reshape(HW, c_vw)               # f32
    occ = occ_ref[0].reshape(HW, Z)                  # f32
    sem = jnp.dot(bev.astype(jnp.bfloat16), wsem_ref[...],
                  preferred_element_type=jnp.float32) + bsem_ref[...]
    sem = jnp.maximum(sem, 0.0)
    com = jnp.dot(occ.astype(jnp.bfloat16), wcom_ref[...],
                  preferred_element_type=jnp.float32) + bcom_ref[...]
    com = jnp.maximum(com, 0.0)
    c_used = Z + c_vw + sem.shape[-1] + com.shape[-1]
    parts = [occ, bev, sem, com]
    if CP > c_used:
        parts.append(jnp.zeros((HW, CP - c_used), jnp.float32))
    feat = jnp.concatenate(parts, axis=-1)           # [HW, CP] f32
    plane = _pad_hw_plane(feat.reshape(H, W, CP))    # [H+2, W+2, CP] f32
    o_ref[...] = plane[None].astype(o_ref.dtype)     # single full-block store


def _conv3x3_padout_kernel(x_ref, w_ref, b_ref, o_ref):
    # 3x3 conv (BN scale folded into w, shift in b) + ReLU, computed as 9
    # shifted bf16 matmuls on an f32 accumulator.  The input plane is read from
    # HBM exactly once (no im2col) and the output is written back with its own
    # zero halo so the next conv needs no separate pad pass.
    _, HP, WP, CIN = x_ref.shape
    H, W = HP - 2, WP - 2
    COUT = w_ref.shape[-1]
    x = x_ref[0].astype(jnp.float32)                 # f32 for clean halo slicing
    acc = jnp.zeros((H * W, COUT), jnp.float32)
    for t in range(9):                               # static unroll over taps
        dh, dw = t // 3, t % 3
        win = x[dh:dh + H, dw:dw + W, :].reshape(H * W, CIN).astype(jnp.bfloat16)
        acc = acc + jnp.dot(win, w_ref[t], preferred_element_type=jnp.float32)
    y = jnp.maximum(acc + b_ref[...], 0.0)
    plane = _pad_hw_plane(y.reshape(H, W, COUT))
    o_ref[...] = plane[None].astype(o_ref.dtype)


def _conv3x3_head_kernel(x_ref, w_ref, b_ref, wout_ref, bout_ref, o_ref):
    # Second 3x3 conv + ReLU fused with the 1x1 classification head.  The head
    # output channels are pre-padded to 128 so the HBM store is lane-dense
    # (unmasked vst); the real nbr_classes*n_height slice happens once outside.
    _, HP, WP, CIN = x_ref.shape
    H, W = HP - 2, WP - 2
    CMID = w_ref.shape[-1]
    NOUT = o_ref.shape[-1]
    x = x_ref[0].astype(jnp.float32)
    acc = jnp.zeros((H * W, CMID), jnp.float32)
    for t in range(9):
        dh, dw = t // 3, t % 3
        win = x[dh:dh + H, dw:dw + W, :].reshape(H * W, CIN).astype(jnp.bfloat16)
        acc = acc + jnp.dot(win, w_ref[t], preferred_element_type=jnp.float32)
    y = jnp.maximum(acc + b_ref[...], 0.0).astype(jnp.bfloat16)
    logits = jnp.dot(y, wout_ref[...],
                     preferred_element_type=jnp.float32) + bout_ref[...]
    o_ref[...] = logits.reshape(1, H, W, NOUT)


# ----------------------------------------------------------------------------
# Kernel wrappers
# ----------------------------------------------------------------------------
def _pick_m_tile(m, cap):
    """Largest multiple-of-8 tile <= cap dividing m, preferring >=2 grid steps."""
    best = None
    t = min(cap, m) // 8 * 8
    while t >= 8:
        if m % t == 0:
            if m // t >= 2:
                return t
            if best is None:
                best = t
        t -= 8
    return best


def point_mlp(x, w, b, *, cap=512):
    """Per-point MLP relu(x @ w + b), x:[M,4]  (VPU broadcast-FMA kernel)."""
    M, K = x.shape
    N = w.shape[1]
    tm = _pick_m_tile(M, cap)
    pad = 0
    if tm is None:
        # TODO(synk): pathological point counts fall back to a single pad+slice.
        tm = 256
        pad = (-M) % tm
        x = jnp.pad(x, ((0, pad), (0, 0)))
    Mp = M + pad
    out = pl.pallas_call(
        _point_mlp_kernel,
        out_shape=jax.ShapeDtypeStruct((Mp, N), jnp.float32),
        grid_spec=pltpu.PrefetchScalarGridSpec(
            num_scalar_prefetch=0,
            grid=(Mp // tm,),
            in_specs=[
                pl.BlockSpec((tm, K), lambda i: (i, 0)),
                pl.BlockSpec((K, N), lambda i: (0, 0)),
                pl.BlockSpec((1, N), lambda i: (0, 0)),
            ],
            out_specs=pl.BlockSpec((tm, N), lambda i: (i, 0)),
        ),
        compiler_params=_compiler_params(1),
    )(x, w, b.reshape(1, N))
    return out[:M] if pad else out


def _pool_tile(g):
    for c in (1024, 512, 256, 128, 64, 32, 16, 8):
        if g % c == 0 and g // c >= 2:
            return c
    return g


def height_max_pool_bev(vw_zbhwc):
    """[Z, B, H, W, C] -> max over Z -> [B, H, W, C], lane-dense streaming max.

    The trailing (B,H,W,C) dims are flattened and re-viewed as [G, 128] so the
    reduction uses full-width vregs and every store is an unmasked vst."""
    Z, B, H, W, C = vw_zbhwc.shape
    flat = B * H * W * C
    x = vw_zbhwc.reshape(Z, flat)
    rem = (-flat) % 128
    if rem:
        # TODO(synk): non-128-divisible BEV volumes fall back to one pad+slice.
        x = jnp.pad(x, ((0, 0), (0, rem)))
    G = (flat + rem) // 128
    x = x.reshape(Z, G, 128)
    tg = _pool_tile(G)
    out = pl.pallas_call(
        _zmax_kernel,
        out_shape=jax.ShapeDtypeStruct((G, 128), jnp.float32),
        grid_spec=pltpu.PrefetchScalarGridSpec(
            num_scalar_prefetch=0,
            grid=(G // tg,),
            in_specs=[pl.BlockSpec((Z, tg, 128), lambda i: (0, i, 0))],
            out_specs=pl.BlockSpec((tg, 128), lambda i: (i, 0)),
        ),
        compiler_params=_compiler_params(1),
    )(x)
    out = out.reshape(-1)
    if rem:
        out = out[:flat]
    return out.reshape(B, H, W, C)


def build_bev_input(bev, occ, params, *, c_pad=128):
    """Fused sem/com 1x1 + concat + channel/halo pad -> x0p [B,H+2,W+2,c_pad] bf16."""
    B, H, W, c_vw = bev.shape
    Z = occ.shape[-1]
    c_sem = params["w_sem"].shape[1]
    c_com = params["w_com"].shape[1]
    assert Z + c_vw + c_sem + c_com <= c_pad
    return pl.pallas_call(
        _bev_builder_kernel,
        out_shape=jax.ShapeDtypeStruct((B, H + 2, W + 2, c_pad), jnp.bfloat16),
        grid_spec=pltpu.PrefetchScalarGridSpec(
            num_scalar_prefetch=0,
            grid=(B,),
            in_specs=[
                pl.BlockSpec((1, H, W, c_vw), lambda b: (b, 0, 0, 0)),
                pl.BlockSpec((1, H, W, Z), lambda b: (b, 0, 0, 0)),
                pl.BlockSpec((c_vw, c_sem), lambda b: (0, 0)),
                pl.BlockSpec((1, c_sem), lambda b: (0, 0)),
                pl.BlockSpec((Z, c_com), lambda b: (0, 0)),
                pl.BlockSpec((1, c_com), lambda b: (0, 0)),
            ],
            out_specs=pl.BlockSpec((1, H + 2, W + 2, c_pad), lambda b: (b, 0, 0, 0)),
        ),
        compiler_params=_compiler_params(1),
    )(bev, occ, params["w_sem"], params["b_sem"].reshape(1, c_sem),
      params["w_com"], params["b_com"].reshape(1, c_com))


def conv3x3_bn_relu_padout(xp, w, b):
    """xp:[B,H+2,W+2,CIN] bf16 (zero halo) -> [B,H+2,W+2,COUT] bf16 (zero halo)."""
    B, HP, WP, CIN = xp.shape
    COUT = w.shape[-1]
    return pl.pallas_call(
        _conv3x3_padout_kernel,
        out_shape=jax.ShapeDtypeStruct((B, HP, WP, COUT), jnp.bfloat16),
        grid_spec=pltpu.PrefetchScalarGridSpec(
            num_scalar_prefetch=0,
            grid=(B,),
            in_specs=[
                pl.BlockSpec((1, HP, WP, CIN), lambda i: (i, 0, 0, 0)),
                pl.BlockSpec((9, CIN, COUT), lambda i: (0, 0, 0)),
                pl.BlockSpec((1, COUT), lambda i: (0, 0)),
            ],
            out_specs=pl.BlockSpec((1, HP, WP, COUT), lambda i: (i, 0, 0, 0)),
        ),
        compiler_params=_compiler_params(1),
    )(xp, w, b.reshape(1, COUT))


def conv3x3_head(xp, w, b, w_out, b_out):
    """3x3 conv + ReLU fused with the 1x1 head -> [B,H,W,NOUT] f32 (NOUT lane-dense)."""
    B, HP, WP, CIN = xp.shape
    H, W = HP - 2, WP - 2
    KTAPS, _, CMID = w.shape
    NOUT = w_out.shape[-1]
    # TODO(synk): at realistic class*height counts, tile NOUT on a second grid
    # axis instead of keeping (CMID, NOUT) fully resident per step.
    return pl.pallas_call(
        _conv3x3_head_kernel,
        out_shape=jax.ShapeDtypeStruct((B, H, W, NOUT), jnp.float32),
        grid_spec=pltpu.PrefetchScalarGridSpec(
            num_scalar_prefetch=0,
            grid=(B,),
            in_specs=[
                pl.BlockSpec((1, HP, WP, CIN), lambda i: (i, 0, 0, 0)),
                pl.BlockSpec((KTAPS, CIN, CMID), lambda i: (0, 0, 0)),
                pl.BlockSpec((1, CMID), lambda i: (0, 0)),
                pl.BlockSpec((CMID, NOUT), lambda i: (0, 0)),
                pl.BlockSpec((1, NOUT), lambda i: (0, 0)),
            ],
            out_specs=pl.BlockSpec((1, H, W, NOUT), lambda i: (i, 0, 0, 0)),
        ),
        compiler_params=_compiler_params(1),
    )(xp, w, b.reshape(1, CMID), w_out, b_out.reshape(1, NOUT))


# ----------------------------------------------------------------------------
# Model (synthetic, deterministic parameters)
# ----------------------------------------------------------------------------
def init_params(key, *, c_vw, c_sem, c_com, c_mid, n_height, nbr_classes,
                c_bev_pad=128, n_out_pad=128):
    """Synthetic surrogate parameters.  BatchNorm scale is folded into weights
    on the host (w' = w * scale); matmul weights are stored in bfloat16; only
    the per-channel shift is applied inside the kernels."""
    n_out = nbr_classes * n_height
    assert n_out <= n_out_pad

    def dense(k, shape, fan_in):
        return jax.random.normal(k, shape, jnp.float32) / jnp.sqrt(jnp.float32(fan_in))

    def bn(k, n):
        ks, kb = jax.random.split(k)
        scale = jax.random.uniform(ks, (n,), jnp.float32, 0.5, 1.5)
        shift = 0.01 * jax.random.normal(kb, (n,), jnp.float32)
        return scale, shift

    ks = jax.random.split(key, 12)
    w_pt = dense(ks[0], (4, c_vw), 4)                      # point MLP 4 -> c_vw
    s_pt, b_pt = bn(ks[1], c_vw)
    w_sem = dense(ks[2], (c_vw, c_sem), c_vw)              # semantic 1x1
    s_sem, b_sem = bn(ks[3], c_sem)
    w_com = dense(ks[4], (n_height, c_com), n_height)      # completion 1x1
    s_com, b_com = bn(ks[5], c_com)
    w_c1 = dense(ks[6], (9, c_bev_pad, c_mid), 9 * c_bev_pad)
    s_c1, b_c1 = bn(ks[7], c_mid)
    w_c2 = dense(ks[8], (9, c_mid, c_mid), 9 * c_mid)
    s_c2, b_c2 = bn(ks[9], c_mid)
    w_out = dense(ks[10], (c_mid, n_out), c_mid)
    s_out, b_out = bn(ks[11], n_out)
    # pad the head to a lane-dense output (multiple of 128); sliced once outside
    w_out_p = jnp.zeros((c_mid, n_out_pad), jnp.float32).at[:, :n_out].set(w_out * s_out)
    b_out_p = jnp.zeros((n_out_pad,), jnp.float32).at[:n_out].set(b_out)

    bf = jnp.bfloat16
    return {
        "w_pt": w_pt * s_pt[None, :], "b_pt": b_pt,
        "w_sem": (w_sem * s_sem[None, :]).astype(bf), "b_sem": b_sem,
        "w_com": (w_com * s_com[None, :]).astype(bf), "b_com": b_com,
        "w_c1": (w_c1 * s_c1[None, None, :]).astype(bf), "b_c1": b_c1,
        "w_c2": (w_c2 * s_c2[None, None, :]).astype(bf), "b_c2": b_c2,
        "w_out": w_out_p.astype(bf), "b_out": b_out_p,
    }


def occrwkv_forward(params, example, cfg):
    """Inference-phase OccRWKV forward.  Returns {'pred_semantic_1_1': ...}."""
    nbr_classes = cfg["NCLASS"]
    X, Y, Z = cfg["SIZES"]                      # sizes = [X, Y, Z]; n_height = Z
    lims = cfg["LIMS"]
    gm = cfg["GRID_METERS"]
    n_height = Z
    W_bev, H_bev = X, Y                         # NCHW plane: H <- Y, W <- X

    points_list = example["points"]
    B = len(points_list)
    pc = jnp.concatenate(points_list, axis=0)                       # [Ntot, 4]
    b_idx = jnp.concatenate(
        [jnp.full((p.shape[0],), i, jnp.int32) for i, p in enumerate(points_list)])

    # ---- PcPreprocessor surrogate: per-point MLP (Pallas, VPU) + voxel scatter
    feats = point_mlp(pc, params["w_pt"], params["b_pt"])           # [Ntot, c_vw]
    c_vw = feats.shape[1]
    ix = jnp.clip(jnp.floor((pc[:, 0] - lims[0][0]) / gm[0]).astype(jnp.int32), 0, X - 1)
    iy = jnp.clip(jnp.floor((pc[:, 1] - lims[1][0]) / gm[1]).astype(jnp.int32), 0, Y - 1)
    iz = jnp.clip(jnp.floor((pc[:, 2] - lims[2][0]) / gm[2]).astype(jnp.int32), 0, Z - 1)
    # scatter directly into Z-major layout so the height-pool needs no transpose
    flat = ((iz * B + b_idx) * H_bev + iy) * W_bev + ix
    # TODO(synk): data-dependent point->voxel scatter-mean kept in plain JAX
    vox_sum = jnp.zeros((Z * B * H_bev * W_bev, c_vw), jnp.float32).at[flat].add(feats)
    vox_cnt = jnp.zeros((Z * B * H_bev * W_bev, 1), jnp.float32).at[flat].add(1.0)
    vw_dense = (vox_sum / jnp.maximum(vox_cnt, 1.0)).reshape(Z, B, H_bev, W_bev, c_vw)

    # ---- bev_projection: max over height (Pallas, lane-dense streaming max)
    bev_dense = height_max_pool_bev(vw_dense)                       # [B, H, W, c_vw]

    # ---- occupancy: [B, X, Y, Z] -> NCHW [B, Z, Y, X] == NHWC [B, Y, X, Z]
    occ_nhwc = jnp.transpose(example["occupancy"].astype(jnp.float32), (0, 2, 1, 3))

    # ---- fused Semantic/Completion 1x1s + concat + lane/halo pad (Pallas)
    x0p = build_bev_input(bev_dense, occ_nhwc, params)              # [B,H+2,W+2,128] bf16

    # ---- BEVUNetv1 surrogate: 3x3 conv, then 3x3 conv fused with the 1x1 head
    x1p = conv3x3_bn_relu_padout(x0p, params["w_c1"], params["b_c1"])
    logits_p = conv3x3_head(x1p, params["w_c2"], params["b_c2"],
                            params["w_out"], params["b_out"])       # [B,H,W,128] f32
    logits = logits_p[..., :nbr_classes * n_height]                 # single slice

    # ---- final reshape / permute exactly as in the PyTorch module
    x_nchw = jnp.transpose(logits, (0, 3, 1, 2))                    # [B, C*Z, H, W]
    x = x_nchw.reshape(B, nbr_classes, n_height, H_bev, W_bev)
    out_scale_1_1 = jnp.transpose(x, (0, 1, 4, 3, 2))               # [B, C, X, Y, Z]
    # TODO(synk): trainval loss (cross_entropy + lovasz_softmax) not implemented;
    # this reproduces the phase != 'trainval' return path.
    return {"pred_semantic_1_1": out_scale_1_1}


# ----------------------------------------------------------------------------
if __name__ == "__main__":
    cfg = {
        "NCLASS": 4,
        "SIZES": [16, 16, 8],                   # X, Y, Z  (n_height = 8)
        "LIMS": [[0.0, 16.0], [0.0, 16.0], [0.0, 4.0]],
        "GRID_METERS": [1.0, 1.0, 0.5],
    }
    B, N_PTS = 2, 256
    key = jax.random.PRNGKey(0)
    k_pts, k_occ, k_par = jax.random.split(key, 3)

    # points: per-batch [N, 4] = (x, y, z, intensity) inside LIMS
    pts_all = jax.random.uniform(k_pts, (B, N_PTS, 4), jnp.float32)
    lo = jnp.array([0.0, 0.0, 0.0, 0.0])
    hi = jnp.array([16.0, 16.0, 4.0, 1.0])
    pts_all = pts_all * (hi - lo) + lo
    example = {
        "points": [pts_all[i] for i in range(B)],
        "occupancy": jax.random.bernoulli(k_occ, 0.3, (B, 16, 16, 8)).astype(
            jnp.float32),
    }

    params = init_params(k_par, c_vw=16, c_sem=8, c_com=8, c_mid=128,
                         n_height=8, nbr_classes=4)

    out = occrwkv_forward(params, example, cfg)
    pred = jax.block_until_ready(out["pred_semantic_1_1"])
    assert pred.shape == (2, 4, 16, 16, 8), pred.shape
    assert pred.dtype == jnp.float32
    print("KERNEL_OK")
</pallas_src>

<mosaic_0001>
module attributes {stable_mosaic.version = 11 : i64} {
  func.func @_point_mlp_kernel(%arg0: i32, %arg1: memref<256x4xf32, #tpu.memory_space<vmem>>, %arg2: memref<4x16xf32, #tpu.memory_space<vmem>>, %arg3: memref<1x16xf32, #tpu.memory_space<vmem>>, %arg4: memref<256x16xf32, #tpu.memory_space<vmem>>) attributes {dimension_semantics = [#tpu.dimension_semantics<parallel>], iteration_bounds = array<i64: 2>, scalar_prefetch = 0 : i64, scratch_operands = 0 : i64, tpu.core_type = #tpu.core_type<tc>, window_params = [{transform_indices = @transform_0, window_bounds = array<i64: 256, 4>}, {pipeline_mode = #tpu.pipeline_mode<synchronous>, transform_indices = @transform_1, window_bounds = array<i64: 4, 16>}, {pipeline_mode = #tpu.pipeline_mode<synchronous>, transform_indices = @transform_2, window_bounds = array<i64: 1, 16>}, {transform_indices = @transform_3, window_bounds = array<i64: 256, 16>}]} {
    %c0 = arith.constant 0 : index
    %c0_0 = arith.constant 0 : index
    %0 = vector.load %arg1[%c0, %c0_0] : memref<256x4xf32, #tpu.memory_space<vmem>>, vector<256x4xf32>
    %c0_1 = arith.constant 0 : index
    %c0_2 = arith.constant 0 : index
    %1 = vector.load %arg2[%c0_1, %c0_2] : memref<4x16xf32, #tpu.memory_space<vmem>>, vector<4x16xf32>
    %cst = arith.constant 0.000000e+00 : f32
    %2 = vector.broadcast %cst : f32 to vector<256x16xf32>
    %3 = vector.extract_strided_slice %0 {offsets = [0, 0], sizes = [256, 1], strides = [1, 1]} : vector<256x4xf32> to vector<256x1xf32>
    %4 = vector.extract_strided_slice %1 {offsets = [0, 0], sizes = [1, 16], strides = [1, 1]} : vector<4x16xf32> to vector<1x16xf32>
    %5 = vector.broadcast %3 : vector<256x1xf32> to vector<256x16xf32>
    %6 = vector.broadcast %4 : vector<1x16xf32> to vector<256x16xf32>
    %7 = arith.mulf %5, %6 : vector<256x16xf32>
    %8 = arith.addf %2, %7 : vector<256x16xf32>
    %9 = vector.extract_strided_slice %0 {offsets = [0, 1], sizes = [256, 1], strides = [1, 1]} : vector<256x4xf32> to vector<256x1xf32>
    %10 = vector.extract_strided_slice %1 {offsets = [1, 0], sizes = [1, 16], strides = [1, 1]} : vector<4x16xf32> to vector<1x16xf32>
    %11 = vector.broadcast %9 : vector<256x1xf32> to vector<256x16xf32>
    %12 = vector.broadcast %10 : vector<1x16xf32> to vector<256x16xf32>
    %13 = arith.mulf %11, %12 : vector<256x16xf32>
    %14 = arith.addf %8, %13 : vector<256x16xf32>
    %15 = vector.extract_strided_slice %0 {offsets = [0, 2], sizes = [256, 1], strides = [1, 1]} : vector<256x4xf32> to vector<256x1xf32>
    %16 = vector.extract_strided_slice %1 {offsets = [2, 0], sizes = [1, 16], strides = [1, 1]} : vector<4x16xf32> to vector<1x16xf32>
    %17 = vector.broadcast %15 : vector<256x1xf32> to vector<256x16xf32>
    %18 = vector.broadcast %16 : vector<1x16xf32> to vector<256x16xf32>
    %19 = arith.mulf %17, %18 : vector<256x16xf32>
    %20 = arith.addf %14, %19 : vector<256x16xf32>
    %21 = vector.extract_strided_slice %0 {offsets = [0, 3], sizes = [256, 1], strides = [1, 1]} : vector<256x4xf32> to vector<256x1xf32>
    %22 = vector.extract_strided_slice %1 {offsets = [3, 0], sizes = [1, 16], strides = [1, 1]} : vector<4x16xf32> to vector<1x16xf32>
    %23 = vector.broadcast %21 : vector<256x1xf32> to vector<256x16xf32>
    %24 = vector.broadcast %22 : vector<1x16xf32> to vector<256x16xf32>
    %25 = arith.mulf %23, %24 : vector<256x16xf32>
    %26 = arith.addf %20, %25 : vector<256x16xf32>
    %c0_3 = arith.constant 0 : index
    %c0_4 = arith.constant 0 : index
    %27 = vector.load %arg3[%c0_3, %c0_4] : memref<1x16xf32, #tpu.memory_space<vmem>>, vector<1x16xf32>
    %28 = vector.broadcast %27 : vector<1x16xf32> to vector<256x16xf32>
    %29 = arith.addf %26, %28 : vector<256x16xf32>
    %cst_5 = arith.constant 0.000000e+00 : f32
    %30 = vector.broadcast %cst_5 : f32 to vector<256x16xf32>
    %31 = arith.maximumf %29, %30 : vector<256x16xf32>
    %c0_6 = arith.constant 0 : index
    %c0_7 = arith.constant 0 : index
    %32 = vector.load %arg4[%c0_6, %c0_7] : memref<256x16xf32, #tpu.memory_space<vmem>>, vector<256x16xf32>
    tpu.vector_store %arg4[%c0_6, %c0_7], %31 {strides = array<i32>} : memref<256x16xf32, #tpu.memory_space<vmem>>, vector<256x16xf32>,
    return
  }
  func.func @transform_0(%arg0: i32) -> (i32, i32) {
    %c0_i32 = arith.constant 0 : i32
    %c0_i32_0 = arith.constant 0 : i32
    return %arg0, %c0_i32 : i32, i32
  }
  func.func @transform_1(%arg0: i32) -> (i32, i32) {
    %c0_i32 = arith.constant 0 : i32
    %c0_i32_0 = arith.constant 0 : i32
    %c0_i32_1 = arith.constant 0 : i32
    return %c0_i32, %c0_i32_0 : i32, i32
  }
  func.func @transform_2(%arg0: i32) -> (i32, i32) {
    %c0_i32 = arith.constant 0 : i32
    %c0_i32_0 = arith.constant 0 : i32
    %c0_i32_1 = arith.constant 0 : i32
    return %c0_i32, %c0_i32_0 : i32, i32
  }
  func.func @transform_3(%arg0: i32) -> (i32, i32) {
    %c0_i32 = arith.constant 0 : i32
    %c0_i32_0 = arith.constant 0 : i32
    return %arg0, %c0_i32 : i32, i32
  }
}

</mosaic_0001>

<llo_original>
// kernel: tpu_custom_call.1
$region0: #{tpu_custom_call.1}
  #allocation0 [shape = 'u32[]', space=smem, size = 0x4, offset = 0x4, fixed_abs, tag = 'smem constant byte address 0x4 - core index']
  #allocation1 [shape = 'u32[144,128]{1,0:T(1,128)}', space=vmem, size = 0x12000, scoped, tag = 'internal scratch']
  %s0 = inlined_call_operand.vmem [shape: f32[512,4], index: 0, kind: input, shape index: {}]
  %s1 = inlined_call_operand.vmem [shape: f32[4,16], index: 1, kind: input, shape index: {}]
  %s2 = inlined_call_operand.vmem [shape: f32[1,16], index: 2, kind: input, shape index: {}]
  %s3 = inlined_call_operand.vmem [shape: f32[512,16], index: 3, kind: output, shape index: {}]
  %s4 = sld [smem:[#allocation0]]
  $region45: #{tpu_custom_call.1} parent=0
    _
  %s6 = ssub.s32 1, %s4
  %s7 = scalar_select 0, %s6, %s4
  loop: start=0, step=1, limit=4
  $region2: #{tpu_custom_call.1} parent=0 // loop_pre_header
    _
  $region3: #{tpu_custom_call.1} parent=0 // loop_header
    %s9 = sphi 0, %s13
    %p10 = scmp.ge.s32.totalorder %s9, 4
    %s19 = sphi 0, %s21
    %s22 = sphi 0, %s19
    %s23 = sphi 0, %s22
    %s39 = sphi 0, %s23
    %s43 = sphi 0, %s43
    %s45 = sphi 0, %s43
    %s46 = sphi 0, %s45
    %s60 = sphi 0, %s46
    %s64 = sphi 0, %s64
    %s66 = sphi 0, %s64
    %s67 = sphi 0, %s66
    %s81 = sphi 0, %s67
    %s87 = sphi 0, %s89
    %s90 = sphi 0, %s87
    %s91 = sphi 0, %s90
    %s107 = sphi 0, %s91
  $region4: #{tpu_custom_call.1} parent=0 // loop_header_branch
    %12 = sbr.rel (%p10) target = $region8
  $region5: #{tpu_custom_call.1} parent=0 // loop_body
    %s14 = ssub.s32 %s9, 1
    %s15 = ssub.s32 %s9, 2
    %s16 = sadd.s32 %s9, 1
    %s17 = ssub.s32 %s9, %s16
    %p18 = scmp.eq.s32.totalorder %s17, 0
    %s20 = sadd.s32 %s19, 1
    %s21 = scalar_select %p18, %s19, %s20
    %p24 = pneg %p18
    %p25 = scmp.eq.s32.totalorder %s9, 1
    %p26 = por %p24, %p25
    %p27 = scmp.ne.s32.totalorder %s19, %s22
    %p28 = scmp.eq.s32.totalorder %s9, 0
    %p29 = por %p27, %p28
    %p30 = scmp.ne.s32.totalorder %s19, %s22
    %p31 = scmp.eq.s32.totalorder %s14, 1
    %p32 = por %p30, %p31
    %p33 = scmp.ne.s32.totalorder %s22, %s23
    %p34 = scmp.eq.s32.totalorder %s14, 0
    %p35 = por %p33, %p34
    %p36 = scmp.ne.s32.totalorder %s22, %s23
    %p37 = scmp.eq.s32.totalorder %s15, 1
    %p38 = por %p36, %p37
    %p40 = scmp.ne.s32.totalorder %s23, %s39
    %p41 = scmp.eq.s32.totalorder %s15, 0
    %p42 = por %p40, %p41
    %s44 = sadd.s32 %s43, 1
    %p47 = scmp.eq.s32.totalorder %s9, 1
    %p48 = scmp.ne.s32.totalorder %s43, %s45
    %p49 = scmp.eq.s32.totalorder %s9, 0
    %p50 = por %p48, %p49
    %p51 = scmp.ne.s32.totalorder %s43, %s45
    %p52 = scmp.eq.s32.totalorder %s14, 1
    %p53 = por %p51, %p52
    %p54 = scmp.ne.s32.totalorder %s45, %s46
    %p55 = scmp.eq.s32.totalorder %s14, 0
    %p56 = por %p54, %p55
    %p57 = scmp.ne.s32.totalorder %s45, %s46
    %p58 = scmp.eq.s32.totalorder %s15, 1
    %p59 = por %p57, %p58
    %p61 = scmp.ne.s32.totalorder %s46, %s60
    %p62 = scmp.eq.s32.totalorder %s15, 0
    %p63 = por %p61, %p62
    %s65 = sadd.s32 %s64, 1
    %p68 = scmp.eq.s32.totalorder %s9, 1
    %p69 = scmp.ne.s32.totalorder %s64, %s66
    %p70 = scmp.eq.s32.totalorder %s9, 0
    %p71 = por %p69, %p70
    %p72 = scmp.ne.s32.totalorder %s64, %s66
    %p73 = scmp.eq.s32.totalorder %s14, 1
    %p74 = por %p72, %p73
    %p75 = scmp.ne.s32.totalorder %s66, %s67
    %p76 = scmp.eq.s32.totalorder %s14, 0
    %p77 = por %p75, %p76
    %p78 = scmp.ne.s32.totalorder %s66, %s67
    %p79 = scmp.eq.s32.totalorder %s15, 1
    %p80 = por %p78, %p79
    %p82 = scmp.ne.s32.totalorder %s67, %s81
    %p83 = scmp.eq.s32.totalorder %s15, 0
    %p84 = por %p82, %p83
    %s85 = ssub.s32 %s9, %s16
    %p86 = scmp.eq.s32.totalorder %s85, 0
    %s88 = sadd.s32 %s87, 1
    %s89 = scalar_select %p86, %s87, %s88
    %p92 = pneg %p86
    %p93 = scmp.eq.s32.totalorder %s9, 1
    %p94 = por %p92, %p93
    %p95 = scmp.ne.s32.totalorder %s87, %s90
    %p96 = scmp.eq.s32.totalorder %s9, 0
    %p97 = por %p95, %p96
    %p98 = scmp.ne.s32.totalorder %s87, %s90
    %p99 = scmp.eq.s32.totalorder %s14, 1
    %p100 = por %p98, %p99
    %p101 = scmp.ne.s32.totalorder %s90, %s91
    %p102 = scmp.eq.s32.totalorder %s14, 0
    %p103 = por %p101, %p102
    %p104 = scmp.ne.s32.totalorder %s90, %s91
    %p105 = scmp.eq.s32.totalorder %s15, 1
    %p106 = por %p104, %p105
    %p108 = scmp.ne.s32.totalorder %s91, %s107
    %p109 = scmp.eq.s32.totalorder %s15, 0
    %p110 = por %p108, %p109
    %p111 = scmp.le.s32.totalorder 1, %s9
    %p112 = scmp.lt.s32.totalorder %s9, 3
    %p113 = pnand %p111, %p112
    %p114 = pneg %p113
    // Predicated region
    $region9: #{tpu_custom_call.1} parent=5 // pred_check
      _
    $region10: #{tpu_custom_call.1} parent=5 // pred_check_branch
      %116 = sbr.rel (%p113) target = $region12
    $region11: #{tpu_custom_call.1} parent=5 // pred_region
      %s117 = ssub.s32 %s9, 1
      // Predicated region
      $region13: #{tpu_custom_call.1} parent=11 // pred_check
        %p118 = pneg %p56
      $region14: #{tpu_custom_call.1} parent=11 // pred_check_branch
        %120 = sbr.rel (%p118) target = $region16
      $region15: #{tpu_custom_call.1} parent=11 // pred_region
        _
      $region16: #{tpu_custom_call.1} parent=11 // pred_fallthru
        _
      // Predicated region
      $region17: #{tpu_custom_call.1} parent=11 // pred_check
        %p121 = pneg %p77
      $region18: #{tpu_custom_call.1} parent=11 // pred_check_branch
        %123 = sbr.rel (%p121) target = $region20
      $region19: #{tpu_custom_call.1} parent=11 // pred_region
        _
      $region20: #{tpu_custom_call.1} parent=11 // pred_fallthru
        _
    $region12: #{tpu_custom_call.1} parent=5 // pred_fallthru
      _
    %p124 = scmp.lt.s32.totalorder %s9, 2
    // Predicated region
    $region21: #{tpu_custom_call.1} parent=5 // pred_check
      %p125 = pneg %p124
    $region22: #{tpu_custom_call.1} parent=5 // pred_check_branch
      %127 = sbr.rel (%p125) target = $region24
    $region23: #{tpu_custom_call.1} parent=5 // pred_region
      // Predicated region
      $region25: #{tpu_custom_call.1} parent=23 // pred_check
        %p128 = pneg %p29
      $region26: #{tpu_custom_call.1} parent=23 // pred_check_branch
        %130 = sbr.rel (%p128) target = $region28
      $region27: #{tpu_custom_call.1} parent=23 // pred_region
        %s131 = smul.u32 32, %s9
        %p132 = scmp.lt.s32.totalorder %s131, 63
        %s133 = scalar_select %p132, %s131, 63
        %s134 = smul.addr %s133, 8
        %s135 = scalar_lea.vmem %s0, %s134
        %s136 = smul.u32 32, %s9
      $region28: #{tpu_custom_call.1} parent=23 // pred_fallthru
        _
    $region24: #{tpu_custom_call.1} parent=5 // pred_fallthru
      _
    %p137 = scmp.le.s32.totalorder 1, %s9
    %p138 = scmp.lt.s32.totalorder %s9, 3
    %p139 = pnand %p137, %p138
    %p140 = pneg %p139
    // Predicated region
    $region29: #{tpu_custom_call.1} parent=5 // pred_check
      _
    $region30: #{tpu_custom_call.1} parent=5 // pred_check_branch
      %142 = sbr.rel (%p139) target = $region32
    $region31: #{tpu_custom_call.1} parent=5 // pred_region
      %s143 = ssub.s32 %s9, 1
      %s144 = smul.u32 32, %s14
      %p145 = scmp.lt.s32.totalorder %s144, 63
      %s146 = scalar_select %p145, %s144, 63
      %s147 = smul.addr %s146, 8
      %s148 = scalar_lea.vmem %s0, %s147
      %p149 = pneg %p35
      %p150 = pneg %p32
      %p151 = pneg %p56
      %p152 = pneg %p53
      %p153 = pneg %p77
      %p154 = pneg %p74
      %p155 = pneg %p103
      %p156 = pneg %p100
      %s157 = smul.u32 32, %s14
      %p158 = scmp.lt.s32.totalorder %s157, 63
      %s159 = scalar_select %p158, %s157, 63
      %s160 = smul.addr %s159, 8
      %s161 = scalar_lea.vmem %s3, %s160
      %s162 = smul.u32 32, %s14
      %p163 = scmp.lt.s32.totalorder %s162, 63
      %s164 = scalar_select %p163, %s162, 63
      %s165 = smul.addr %s164, 8
      %s166 = scalar_lea.vmem %s0, %s165
      %s167 = smul.u32 32, %s14
      %s168 = smul.u32 32, %s14
      %p169 = scmp.lt.s32.totalorder %s168, 63
      %s170 = scalar_select %p169, %s168, 63
      %s171 = smul.addr %s170, 8
      %s172 = scalar_lea.vmem %s3, %s171
      %s173 = smul.u32 32, %s14
      %v174 = vld [vmem:[%s166] sm:$0xff]
      %v175 = vld [vmem:[%s166 + $0x8] sm:$0xff]
      %v176 = vld [vmem:[%s166 + $0x10] sm:$0xff]
      %v177 = vld [vmem:[%s166 + $0x18] sm:$0xff]
      %v178 = vld [vmem:[%s166 + $0x20] sm:$0xff]
      %v179 = vld [vmem:[%s166 + $0x28] sm:$0xff]
      %v180 = vld [vmem:[%s166 + $0x30] sm:$0xff]
      %v181 = vld [vmem:[%s166 + $0x38] sm:$0xff]
      %v182 = vld [vmem:[%s166 + $0x40] sm:$0xff]
      %v183 = vld [vmem:[%s166 + $0x48] sm:$0xff]
      %v184 = vld [vmem:[%s166 + $0x50] sm:$0xff]
      %v185 = vld [vmem:[%s166 + $0x58] sm:$0xff]
      %v186 = vld [vmem:[%s166 + $0x60] sm:$0xff]
      %v187 = vld [vmem:[%s166 + $0x68] sm:$0xff]
      %v188 = vld [vmem:[%s166 + $0x70] sm:$0xff]
      %v189 = vld [vmem:[%s166 + $0x78] sm:$0xff]
      %v190 = vld [vmem:[%s166 + $0x80] sm:$0xff]
      %v191 = vld [vmem:[%s166 + $0x88] sm:$0xff]
      %v192 = vld [vmem:[%s166 + $0x90] sm:$0xff]
      %v193 = vld [vmem:[%s166 + $0x98] sm:$0xff]
      %v194 = vld [vmem:[%s166 + $0xa0] sm:$0xff]
      %v195 = vld [vmem:[%s166 + $0xa8] sm:$0xff]
      %v196 = vld [vmem:[%s166 + $0xb0] sm:$0xff]
      %v197 = vld [vmem:[%s166 + $0xb8] sm:$0xff]
      %v198 = vld [vmem:[%s166 + $0xc0] sm:$0xff]
      %v199 = vld [vmem:[%s166 + $0xc8] sm:$0xff]
      %v200 = vld [vmem:[%s166 + $0xd0] sm:$0xff]
      %v201 = vld [vmem:[%s166 + $0xd8] sm:$0xff]
      %v202 = vld [vmem:[%s166 + $0xe0] sm:$0xff]
      %v203 = vld [vmem:[%s166 + $0xe8] sm:$0xff]
      %v204 = vld [vmem:[%s166 + $0xf0] sm:$0xff]
      %v205 = vld [vmem:[%s166 + $0xf8] sm:$0xff]
      %v206 = vld [vmem:[%s1] sm:$0xf]
      %208 = vset.pattern.permute.xlu0 0
      %209 = vperm.xlu0 %208, %v174
      %v210 = vpop.permute.xlu0 %209
      %213 = vset.pattern.permute.xlu0 0
      %214 = vperm.xlu0 %213, %v175
      %v215 = vpop.permute.xlu0 %214
      %218 = vset.pattern.permute.xlu0 0
      %219 = vperm.xlu0 %218, %v176
      %v220 = vpop.permute.xlu0 %219
      %223 = vset.pattern.permute.xlu0 0
      %224 = vperm.xlu0 %223, %v177
      %v225 = vpop.permute.xlu0 %224
      %228 = vset.pattern.permute.xlu0 0
      %229 = vperm.xlu0 %228, %v178
      %v230 = vpop.permute.xlu0 %229
      %233 = vset.pattern.permute.xlu0 0
      %234 = vperm.xlu0 %233, %v179
      %v235 = vpop.permute.xlu0 %234
      %238 = vset.pattern.permute.xlu0 0
      %239 = vperm.xlu0 %238, %v180
      %v240 = vpop.permute.xlu0 %239
      %243 = vset.pattern.permute.xlu0 0
      %244 = vperm.xlu0 %243, %v181
      %v245 = vpop.permute.xlu0 %244
      %248 = vset.pattern.permute.xlu0 0
      %249 = vperm.xlu0 %248, %v182
      %v250 = vpop.permute.xlu0 %249
      %253 = vset.pattern.permute.xlu0 0
      %254 = vperm.xlu0 %253, %v183
      %v255 = vpop.permute.xlu0 %254
      %258 = vset.pattern.permute.xlu0 0
      %259 = vperm.xlu0 %258, %v184
      %v260 = vpop.permute.xlu0 %259
      %263 = vset.pattern.permute.xlu0 0
      %264 = vperm.xlu0 %263, %v185
      %v265 = vpop.permute.xlu0 %264
      %268 = vset.pattern.permute.xlu0 0
      %269 = vperm.xlu0 %268, %v186
      %v270 = vpop.permute.xlu0 %269
      %273 = vset.pattern.permute.xlu0 0
      %274 = vperm.xlu0 %273, %v187
      %v275 = vpop.permute.xlu0 %274
      %278 = vset.pattern.permute.xlu0 0
      %279 = vperm.xlu0 %278, %v188
      %v280 = vpop.permute.xlu0 %279
      %283 = vset.pattern.permute.xlu0 0
      %284 = vperm.xlu0 %283, %v189
      %v285 = vpop.permute.xlu0 %284
      %288 = vset.pattern.permute.xlu0 0
      %289 = vperm.xlu0 %288, %v190
      %v290 = vpop.permute.xlu0 %289
      %293 = vset.pattern.permute.xlu0 0
      %294 = vperm.xlu0 %293, %v191
      %v295 = vpop.permute.xlu0 %294
      %298 = vset.pattern.permute.xlu0 0
      %299 = vperm.xlu0 %298, %v192
      %v300 = vpop.permute.xlu0 %299
      %303 = vset.pattern.permute.xlu0 0
      %304 = vperm.xlu0 %303, %v193
      %v305 = vpop.permute.xlu0 %304
      %308 = vset.pattern.permute.xlu0 0
      %309 = vperm.xlu0 %308, %v194
      %v310 = vpop.permute.xlu0 %309
      %313 = vset.pattern.permute.xlu0 0
      %314 = vperm.xlu0 %313, %v195
      %v315 = vpop.permute.xlu0 %314
      %318 = vset.pattern.permute.xlu0 0
      %319 = vperm.xlu0 %318, %v196
      %v320 = vpop.permute.xlu0 %319
      %323 = vset.pattern.permute.xlu0 0
      %324 = vperm.xlu0 %323, %v197
      %v325 = vpop.permute.xlu0 %324
      %328 = vset.pattern.permute.xlu0 0
      %329 = vperm.xlu0 %328, %v198
      %v330 = vpop.permute.xlu0 %329
      %333 = vset.pattern.permute.xlu0 0
      %334 = vperm.xlu0 %333, %v199
      %v335 = vpop.permute.xlu0 %334
      %338 = vset.pattern.permute.xlu0 0
      %339 = vperm.xlu0 %338, %v200
      %v340 = vpop.permute.xlu0 %339
      %343 = vset.pattern.permute.xlu0 0
      %344 = vperm.xlu0 %343, %v201
      %v345 = vpop.permute.xlu0 %344
      %348 = vset.pattern.permute.xlu0 0
      %349 = vperm.xlu0 %348, %v202
      %v350 = vpop.permute.xlu0 %349
      %353 = vset.pattern.permute.xlu0 0
      %354 = vperm.xlu0 %353, %v203
      %v355 = vpop.permute.xlu0 %354
      %358 = vset.pattern.permute.xlu0 0
      %359 = vperm.xlu0 %358, %v204
      %v360 = vpop.permute.xlu0 %359
      %363 = vset.pattern.permute.xlu0 0
      %364 = vperm.xlu0 %363, %v205
      %v365 = vpop.permute.xlu0 %364
      %v367 = vlaneseq
      %v368 = vshrl.u32 %v367, 7
      %v369 = vsub.s32 0, %v368
      %v370 = vrot.slane %v206, %v369
      %v371 = vmul.f32 %v210, %v370
      %v372 = vmul.f32 %v215, %v370
      %v373 = vmul.f32 %v220, %v370
      %v374 = vmul.f32 %v225, %v370
      %v375 = vmul.f32 %v230, %v370
      %v376 = vmul.f32 %v235, %v370
      %v377 = vmul.f32 %v240, %v370
      %v378 = vmul.f32 %v245, %v370
      %v379 = vmul.f32 %v250, %v370
      %v380 = vmul.f32 %v255, %v370
      %v381 = vmul.f32 %v260, %v370
      %v382 = vmul.f32 %v265, %v370
      %v383 = vmul.f32 %v270, %v370
      %v384 = vmul.f32 %v275, %v370
      %v385 = vmul.f32 %v280, %v370
      %v386 = vmul.f32 %v285, %v370
      %v387 = vmul.f32 %v290, %v370
      %v388 = vmul.f32 %v295, %v370
      %v389 = vmul.f32 %v300, %v370
      %v390 = vmul.f32 %v305, %v370
      %v391 = vmul.f32 %v310, %v370
      %v392 = vmul.f32 %v315, %v370
      %v393 = vmul.f32 %v320, %v370
      %v394 = vmul.f32 %v325, %v370
      %v395 = vmul.f32 %v330, %v370
      %v396 = vmul.f32 %v335, %v370
      %v397 = vmul.f32 %v340, %v370
      %v398 = vmul.f32 %v345, %v370
      %v399 = vmul.f32 %v350, %v370
      %v400 = vmul.f32 %v355, %v370
      %v401 = vmul.f32 %v360, %v370
      %v402 = vmul.f32 %v365, %v370
      %v403 = vadd.f32 %v371, 0.0
      %v404 = vadd.f32 %v372, 0.0
      %v405 = vadd.f32 %v373, 0.0
      %v406 = vadd.f32 %v374, 0.0
      %v407 = vadd.f32 %v375, 0.0
      %v408 = vadd.f32 %v376, 0.0
      %v409 = vadd.f32 %v377, 0.0
      %v410 = vadd.f32 %v378, 0.0
      %v411 = vadd.f32 %v379, 0.0
      %v412 = vadd.f32 %v380, 0.0
      %v413 = vadd.f32 %v381, 0.0
      %v414 = vadd.f32 %v382, 0.0
      %v415 = vadd.f32 %v383, 0.0
      %v416 = vadd.f32 %v384, 0.0
      %v417 = vadd.f32 %v385, 0.0
      %v418 = vadd.f32 %v386, 0.0
      %v419 = vadd.f32 %v387, 0.0
      %v420 = vadd.f32 %v388, 0.0
      %v421 = vadd.f32 %v389, 0.0
      %v422 = vadd.f32 %v390, 0.0
      %v423 = vadd.f32 %v391, 0.0
      %v424 = vadd.f32 %v392, 0.0
      %v425 = vadd.f32 %v393, 0.0
      %v426 = vadd.f32 %v394, 0.0
      %v427 = vadd.f32 %v395, 0.0
      %v428 = vadd.f32 %v396, 0.0
      %v429 = vadd.f32 %v397, 0.0
      %v430 = vadd.f32 %v398, 0.0
      %v431 = vadd.f32 %v399, 0.0
      %v432 = vadd.f32 %v400, 0.0
      %v433 = vadd.f32 %v401, 0.0
      %v434 = vadd.f32 %v402, 0.0
      %435 = vset.pattern.permute.xlu0 1
      %436 = vperm.xlu0 %435, %v174
      %v437 = vpop.permute.xlu0 %436
      %439 = vset.pattern.permute.xlu0 1
      %440 = vperm.xlu0 %439, %v175
      %v441 = vpop.permute.xlu0 %440
      %443 = vset.pattern.permute.xlu0 1
      %444 = vperm.xlu0 %443, %v176
      %v445 = vpop.permute.xlu0 %444
      %447 = vset.pattern.permute.xlu0 1
      %448 = vperm.xlu0 %447, %v177
      %v449 = vpop.permute.xlu0 %448
      %451 = vset.pattern.permute.xlu0 1
      %452 = vperm.xlu0 %451, %v178
      %v453 = vpop.permute.xlu0 %452
      %455 = vset.pattern.permute.xlu0 1
      %456 = vperm.xlu0 %455, %v179
      %v457 = vpop.permute.xlu0 %456
      %459 = vset.pattern.permute.xlu0 1
      %460 = vperm.xlu0 %459, %v180
      %v461 = vpop.permute.xlu0 %460
      %463 = vset.pattern.permute.xlu0 1
      %464 = vperm.xlu0 %463, %v181
      %v465 = vpop.permute.xlu0 %464
      %467 = vset.pattern.permute.xlu0 1
      %468 = vperm.xlu0 %467, %v182
      %v469 = vpop.permute.xlu0 %468
      %471 = vset.pattern.permute.xlu0 1
      %472 = vperm.xlu0 %471, %v183
      %v473 = vpop.permute.xlu0 %472
      %475 = vset.pattern.permute.xlu0 1
      %476 = vperm.xlu0 %475, %v184
      %v477 = vpop.permute.xlu0 %476
      %479 = vset.pattern.permute.xlu0 1
      %480 = vperm.xlu0 %479, %v185
      %v481 = vpop.permute.xlu0 %480
      %483 = vset.pattern.permute.xlu0 1
      %484 = vperm.xlu0 %483, %v186
      %v485 = vpop.permute.xlu0 %484
      %487 = vset.pattern.permute.xlu0 1
      %488 = vperm.xlu0 %487, %v187
      %v489 = vpop.permute.xlu0 %488
      %491 = vset.pattern.permute.xlu0 1
      %492 = vperm.xlu0 %491, %v188
      %v493 = vpop.permute.xlu0 %492
      %495 = vset.pattern.permute.xlu0 1
      %496 = vperm.xlu0 %495, %v189
      %v497 = vpop.permute.xlu0 %496
      %499 = vset.pattern.permute.xlu0 1
      %500 = vperm.xlu0 %499, %v190
      %v501 = vpop.permute.xlu0 %500
      %503 = vset.pattern.permute.xlu0 1
      %504 = vperm.xlu0 %503, %v191
      %v505 = vpop.permute.xlu0 %504
      %507 = vset.pattern.permute.xlu0 1
      %508 = vperm.xlu0 %507, %v192
      %v509 = vpop.permute.xlu0 %508
      %511 = vset.pattern.permute.xlu0 1
      %512 = vperm.xlu0 %511, %v193
      %v513 = vpop.permute.xlu0 %512
      %515 = vset.pattern.permute.xlu0 1
      %516 = vperm.xlu0 %515, %v194
      %v517 = vpop.permute.xlu0 %516
      %519 = vset.pattern.permute.xlu0 1
      %520 = vperm.xlu0 %519, %v195
      %v521 = vpop.permute.xlu0 %520
      %523 = vset.pattern.permute.xlu0 1
      %524 = vperm.xlu0 %523, %v196
      %v525 = vpop.permute.xlu0 %524
      %527 = vset.pattern.permute.xlu0 1
      %528 = vperm.xlu0 %527, %v197
      %v529 = vpop.permute.xlu0 %528
      %531 = vset.pattern.permute.xlu0 1
      %532 = vperm.xlu0 %531, %v198
      %v533 = vpop.permute.xlu0 %532
      %535 = vset.pattern.permute.xlu0 1
      %536 = vperm.xlu0 %535, %v199
      %v537 = vpop.permute.xlu0 %536
      %539 = vset.pattern.permute.xlu0 1
      %540 = vperm.xlu0 %539, %v200
      %v541 = vpop.permute.xlu0 %540
      %543 = vset.pattern.permute.xlu0 1
      %544 = vperm.xlu0 %543, %v201
      %v545 = vpop.permute.xlu0 %544
      %547 = vset.pattern.permute.xlu0 1
      %548 = vperm.xlu0 %547, %v202
      %v549 = vpop.permute.xlu0 %548
      %551 = vset.pattern.permute.xlu0 1
      %552 = vperm.xlu0 %551, %v203
      %v553 = vpop.permute.xlu0 %552
      %555 = vset.pattern.permute.xlu0 1
      %556 = vperm.xlu0 %555, %v204
      %v557 = vpop.permute.xlu0 %556
      %559 = vset.pattern.permute.xlu0 1
      %560 = vperm.xlu0 %559, %v205
      %v561 = vpop.permute.xlu0 %560
      %v563 = vlaneseq
      %v564 = vshrl.u32 %v563, 7
      %v565 = vsub.s32 1, %v564
      %v566 = vrot.slane %v206, %v565
      %v567 = vmul.f32 %v437, %v566
      %v568 = vmul.f32 %v441, %v566
      %v569 = vmul.f32 %v445, %v566
      %v570 = vmul.f32 %v449, %v566
      %v571 = vmul.f32 %v453, %v566
      %v572 = vmul.f32 %v457, %v566
      %v573 = vmul.f32 %v461, %v566
      %v574 = vmul.f32 %v465, %v566
      %v575 = vmul.f32 %v469, %v566
      %v576 = vmul.f32 %v473, %v566
      %v577 = vmul.f32 %v477, %v566
      %v578 = vmul.f32 %v481, %v566
      %v579 = vmul.f32 %v485, %v566
      %v580 = vmul.f32 %v489, %v566
      %v581 = vmul.f32 %v493, %v566
      %v582 = vmul.f32 %v497, %v566
      %v583 = vmul.f32 %v501, %v566
      %v584 = vmul.f32 %v505, %v566
      %v585 = vmul.f32 %v509, %v566
      %v586 = vmul.f32 %v513, %v566
      %v587 = vmul.f32 %v517, %v566
      %v588 = vmul.f32 %v521, %v566
      %v589 = vmul.f32 %v525, %v566
      %v590 = vmul.f32 %v529, %v566
      %v591 = vmul.f32 %v533, %v566
      %v592 = vmul.f32 %v537, %v566
      %v593 = vmul.f32 %v541, %v566
      %v594 = vmul.f32 %v545, %v566
      %v595 = vmul.f32 %v549, %v566
      %v596 = vmul.f32 %v553, %v566
      %v597 = vmul.f32 %v557, %v566
      %v598 = vmul.f32 %v561, %v566
      %v599 = vadd.f32 %v403, %v567
      %v600 = vadd.f32 %v404, %v568
      %v601 = vadd.f32 %v405, %v569
      %v602 = vadd.f32 %v406, %v570
      %v603 = vadd.f32 %v407, %v571
      %v604 = vadd.f32 %v408, %v572
      %v605 = vadd.f32 %v409, %v573
      %v606 = vadd.f32 %v410, %v574
      %v607 = vadd.f32 %v411, %v575
      %v608 = vadd.f32 %v412, %v576
      %v609 = vadd.f32 %v413, %v577
      %v610 = vadd.f32 %v414, %v578
      %v611 = vadd.f32 %v415, %v579
      %v612 = vadd.f32 %v416, %v580
      %v613 = vadd.f32 %v417, %v581
      %v614 = vadd.f32 %v418, %v582
      %v615 = vadd.f32 %v419, %v583
      %v616 = vadd.f32 %v420, %v584
      %v617 = vadd.f32 %v421, %v585
      %v618 = vadd.f32 %v422, %v586
      %v619 = vadd.f32 %v423, %v587
      %v620 = vadd.f32 %v424, %v588
      %v621 = vadd.f32 %v425, %v589
      %v622 = vadd.f32 %v426, %v590
      %v623 = vadd.f32 %v427, %v591
      %v624 = vadd.f32 %v428, %v592
      %v625 = vadd.f32 %v429, %v593
      %v626 = vadd.f32 %v430, %v594
      %v627 = vadd.f32 %v431, %v595
      %v628 = vadd.f32 %v432, %v596
      %v629 = vadd.f32 %v433, %v597
      %v630 = vadd.f32 %v434, %v598
      %631 = vset.pattern.permute.xlu0 2
      %632 = vperm.xlu0 %631, %v174
      %v633 = vpop.permute.xlu0 %632
      %635 = vset.pattern.permute.xlu0 2
      %636 = vperm.xlu0 %635, %v175
      %v637 = vpop.permute.xlu0 %636
      %639 = vset.pattern.permute.xlu0 2
      %640 = vperm.xlu0 %639, %v176
      %v641 = vpop.permute.xlu0 %640
      %643 = vset.pattern.permute.xlu0 2
      %644 = vperm.xlu0 %643, %v177
      %v645 = vpop.permute.xlu0 %644
      %647 = vset.pattern.permute.xlu0 2
      %648 = vperm.xlu0 %647, %v178
      %v649 = vpop.permute.xlu0 %648
      %651 = vset.pattern.permute.xlu0 2
      %652 = vperm.xlu0 %651, %v179
      %v653 = vpop.permute.xlu0 %652
      %655 = vset.pattern.permute.xlu0 2
      %656 = vperm.xlu0 %655, %v180
      %v657 = vpop.permute.xlu0 %656
      %659 = vset.pattern.permute.xlu0 2
      %660 = vperm.xlu0 %659, %v181
      %v661 = vpop.permute.xlu0 %660
      %663 = vset.pattern.permute.xlu0 2
      %664 = vperm.xlu0 %663, %v182
      %v665 = vpop.permute.xlu0 %664
      %667 = vset.pattern.permute.xlu0 2
      %668 = vperm.xlu0 %667, %v183
      %v669 = vpop.permute.xlu0 %668
      %671 = vset.pattern.permute.xlu0 2
      %672 = vperm.xlu0 %671, %v184
      %v673 = vpop.permute.xlu0 %672
      %675 = vset.pattern.permute.xlu0 2
      %676 = vperm.xlu0 %675, %v185
      %v677 = vpop.permute.xlu0 %676
      %679 = vset.pattern.permute.xlu0 2
      %680 = vperm.xlu0 %679, %v186
      %v681 = vpop.permute.xlu0 %680
      %683 = vset.pattern.permute.xlu0 2
      %684 = vperm.xlu0 %683, %v187
      %v685 = vpop.permute.xlu0 %684
      %687 = vset.pattern.permute.xlu0 2
      %688 = vperm.xlu0 %687, %v188
      %v689 = vpop.permute.xlu0 %688
      %691 = vset.pattern.permute.xlu0 2
      %692 = vperm.xlu0 %691, %v189
      %v693 = vpop.permute.xlu0 %692
      %695 = vset.pattern.permute.xlu0 2
      %696 = vperm.xlu0 %695, %v190
      %v697 = vpop.permute.xlu0 %696
      %699 = vset.pattern.permute.xlu0 2
      %700 = vperm.xlu0 %699, %v191
      %v701 = vpop.permute.xlu0 %700
      %703 = vset.pattern.permute.xlu0 2
      %704 = vperm.xlu0 %703, %v192
      %v705 = vpop.permute.xlu0 %704
      %707 = vset.pattern.permute.xlu0 2
      %708 = vperm.xlu0 %707, %v193
      %v709 = vpop.permute.xlu0 %708
      %711 = vset.pattern.permute.xlu0 2
      %712 = vperm.xlu0 %711, %v194
      %v713 = vpop.permute.xlu0 %712
      %715 = vset.pattern.permute.xlu0 2
      %716 = vperm.xlu0 %715, %v195
      %v717 = vpop.permute.xlu0 %716
      %719 = vset.pattern.permute.xlu0 2
      %720 = vperm.xlu0 %719, %v196
      %v721 = vpop.permute.xlu0 %720
      %723 = vset.pattern.permute.xlu0 2
      %724 = vperm.xlu0 %723, %v197
      %v725 = vpop.permute.xlu0 %724
      %727 = vset.pattern.permute.xlu0 2
      %728 = vperm.xlu0 %727, %v198
      %v729 = vpop.permute.xlu0 %728
      %731 = vset.pattern.permute.xlu0 2
      %732 = vperm.xlu0 %731, %v199
      %v733 = vpop.permute.xlu0 %732
      %735 = vset.pattern.permute.xlu0 2
      %736 = vperm.xlu0 %735, %v200
      %v737 = vpop.permute.xlu0 %736
      %739 = vset.pattern.permute.xlu0 2
      %740 = vperm.xlu0 %739, %v201
      %v741 = vpop.permute.xlu0 %740
      %743 = vset.pattern.permute.xlu0 2
      %744 = vperm.xlu0 %743, %v202
      %v745 = vpop.permute.xlu0 %744
      %747 = vset.pattern.permute.xlu0 2
      %748 = vperm.xlu0 %747, %v203
      %v749 = vpop.permute.xlu0 %748
      %751 = vset.pattern.permute.xlu0 2
      %752 = vperm.xlu0 %751, %v204
      %v753 = vpop.permute.xlu0 %752
      %755 = vset.pattern.permute.xlu0 2
      %756 = vperm.xlu0 %755, %v205
      %v757 = vpop.permute.xlu0 %756
      %v759 = vlaneseq
      %v760 = vshrl.u32 %v759, 7
      %v761 = vsub.s32 2, %v760
      %v762 = vrot.slane %v206, %v761
      %v763 = vmul.f32 %v633, %v762
      %v764 = vmul.f32 %v637, %v762
      %v765 = vmul.f32 %v641, %v762
      %v766 = vmul.f32 %v645, %v762
      %v767 = vmul.f32 %v649, %v762
      %v768 = vmul.f32 %v653, %v762
      %v769 = vmul.f32 %v657, %v762
      %v770 = vmul.f32 %v661, %v762
      %v771 = vmul.f32 %v665, %v762
      %v772 = vmul.f32 %v669, %v762
      %v773 = vmul.f32 %v673, %v762
      %v774 = vmul.f32 %v677, %v762
      %v775 = vmul.f32 %v681, %v762
      %v776 = vmul.f32 %v685, %v762
      %v777 = vmul.f32 %v689, %v762
      %v778 = vmul.f32 %v693, %v762
      %v779 = vmul.f32 %v697, %v762
      %v780 = vmul.f32 %v701, %v762
      %v781 = vmul.f32 %v705, %v762
      %v782 = vmul.f32 %v709, %v762
      %v783 = vmul.f32 %v713, %v762
      %v784 = vmul.f32 %v717, %v762
      %v785 = vmul.f32 %v721, %v762
      %v786 = vmul.f32 %v725, %v762
      %v787 = vmul.f32 %v729, %v762
      %v788 = vmul.f32 %v733, %v762
      %v789 = vmul.f32 %v737, %v762
      %v790 = vmul.f32 %v741, %v762
      %v791 = vmul.f32 %v745, %v762
      %v792 = vmul.f32 %v749, %v762
      %v793 = vmul.f32 %v753, %v762
      %v794 = vmul.f32 %v757, %v762
      %v795 = vadd.f32 %v599, %v763
      %v796 = vadd.f32 %v600, %v764
      %v797 = vadd.f32 %v601, %v765
      %v798 = vadd.f32 %v602, %v766
      %v799 = vadd.f32 %v603, %v767
      %v800 = vadd.f32 %v604, %v768
      %v801 = vadd.f32 %v605, %v769
      %v802 = vadd.f32 %v606, %v770
      %v803 = vadd.f32 %v607, %v771
      %v804 = vadd.f32 %v608, %v772
      %v805 = vadd.f32 %v609, %v773
      %v806 = vadd.f32 %v610, %v774
      %v807 = vadd.f32 %v611, %v775
      %v808 = vadd.f32 %v612, %v776
      %v809 = vadd.f32 %v613, %v777
      %v810 = vadd.f32 %v614, %v778
      %v811 = vadd.f32 %v615, %v779
      %v812 = vadd.f32 %v616, %v780
      %v813 = vadd.f32 %v617, %v781
      %v814 = vadd.f32 %v618, %v782
      %v815 = vadd.f32 %v619, %v783
      %v816 = vadd.f32 %v620, %v784
      %v817 = vadd.f32 %v621, %v785
      %v818 = vadd.f32 %v622, %v786
      %v819 = vadd.f32 %v623, %v787
      %v820 = vadd.f32 %v624, %v788
      %v821 = vadd.f32 %v625, %v789
      %v822 = vadd.f32 %v626, %v790
      %v823 = vadd.f32 %v627, %v791
      %v824 = vadd.f32 %v628, %v792
      %v825 = vadd.f32 %v629, %v793
      %v826 = vadd.f32 %v630, %v794
      %827 = vset.pattern.permute.xlu0 3
      %828 = vperm.xlu0 %827, %v174
      %v829 = vpop.permute.xlu0 %828
      %831 = vset.pattern.permute.xlu0 3
      %832 = vperm.xlu0 %831, %v175
      %v833 = vpop.permute.xlu0 %832
      %835 = vset.pattern.permute.xlu0 3
      %836 = vperm.xlu0 %835, %v176
      %v837 = vpop.permute.xlu0 %836
      %839 = vset.pattern.permute.xlu0 3
      %840 = vperm.xlu0 %839, %v177
      %v841 = vpop.permute.xlu0 %840
      %843 = vset.pattern.permute.xlu0 3
      %844 = vperm.xlu0 %843, %v178
      %v845 = vpop.permute.xlu0 %844
      %847 = vset.pattern.permute.xlu0 3
      %848 = vperm.xlu0 %847, %v179
      %v849 = vpop.permute.xlu0 %848
      %851 = vset.pattern.permute.xlu0 3
      %852 = vperm.xlu0 %851, %v180
      %v853 = vpop.permute.xlu0 %852
      %855 = vset.pattern.permute.xlu0 3
      %856 = vperm.xlu0 %855, %v181
      %v857 = vpop.permute.xlu0 %856
      %859 = vset.pattern.permute.xlu0 3
      %860 = vperm.xlu0 %859, %v182
      %v861 = vpop.permute.xlu0 %860
      %863 = vset.pattern.permute.xlu0 3
      %864 = vperm.xlu0 %863, %v183
      %v865 = vpop.permute.xlu0 %864
      %867 = vset.pattern.permute.xlu0 3
      %868 = vperm.xlu0 %867, %v184
      %v869 = vpop.permute.xlu0 %868
      %871 = vset.pattern.permute.xlu0 3
      %872 = vperm.xlu0 %871, %v185
      %v873 = vpop.permute.xlu0 %872
      %875 = vset.pattern.permute.xlu0 3
      %876 = vperm.xlu0 %875, %v186
      %v877 = vpop.permute.xlu0 %876
      %879 = vset.pattern.permute.xlu0 3
      %880 = vperm.xlu0 %879, %v187
      %v881 = vpop.permute.xlu0 %880
      %883 = vset.pattern.permute.xlu0 3
      %884 = vperm.xlu0 %883, %v188
      %v885 = vpop.permute.xlu0 %884
      %887 = vset.pattern.permute.xlu0 3
      %888 = vperm.xlu0 %887, %v189
      %v889 = vpop.permute.xlu0 %888
      %891 = vset.pattern.permute.xlu0 3
      %892 = vperm.xlu0 %891, %v190
      %v893 = vpop.permute.xlu0 %892
      %895 = vset.pattern.permute.xlu0 3
      %896 = vperm.xlu0 %895, %v191
      %v897 = vpop.permute.xlu0 %896
      %899 = vset.pattern.permute.xlu0 3
      %900 = vperm.xlu0 %899, %v192
      %v901 = vpop.permute.xlu0 %900
      %903 = vset.pattern.permute.xlu0 3
      %904 = vperm.xlu0 %903, %v193
      %v905 = vpop.permute.xlu0 %904
      %907 = vset.pattern.permute.xlu0 3
      %908 = vperm.xlu0 %907, %v194
      %v909 = vpop.permute.xlu0 %908
      %911 = vset.pattern.permute.xlu0 3
      %912 = vperm.xlu0 %911, %v195
      %v913 = vpop.permute.xlu0 %912
      %915 = vset.pattern.permute.xlu0 3
      %916 = vperm.xlu0 %915, %v196
      %v917 = vpop.permute.xlu0 %916
      %919 = vset.pattern.permute.xlu0 3
      %920 = vperm.xlu0 %919, %v197
      %v921 = vpop.permute.xlu0 %920
      %923 = vset.pattern.permute.xlu0 3
      %924 = vperm.xlu0 %923, %v198
      %v925 = vpop.permute.xlu0 %924
      %927 = vset.pattern.permute.xlu0 3
      %928 = vperm.xlu0 %927, %v199
      %v929 = vpop.permute.xlu0 %928
      %931 = vset.pattern.permute.xlu0 3
      %932 = vperm.xlu0 %931, %v200
      %v933 = vpop.permute.xlu0 %932
      %935 = vset.pattern.permute.xlu0 3
      %936 = vperm.xlu0 %935, %v201
      %v937 = vpop.permute.xlu0 %936
      %939 = vset.pattern.permute.xlu0 3
      %940 = vperm.xlu0 %939, %v202
      %v941 = vpop.permute.xlu0 %940
      %943 = vset.pattern.permute.xlu0 3
      %944 = vperm.xlu0 %943, %v203
      %v945 = vpop.permute.xlu0 %944
      %947 = vset.pattern.permute.xlu0 3
      %948 = vperm.xlu0 %947, %v204
      %v949 = vpop.permute.xlu0 %948
      %951 = vset.pattern.permute.xlu0 3
      %952 = vperm.xlu0 %951, %v205
      %v953 = vpop.permute.xlu0 %952
      %v955 = vlaneseq
      %v956 = vshrl.u32 %v955, 7
      %v957 = vsub.s32 3, %v956
      %v958 = vrot.slane %v206, %v957
      %v959 = vmul.f32 %v829, %v958
      %v960 = vmul.f32 %v833, %v958
      %v961 = vmul.f32 %v837, %v958
      %v962 = vmul.f32 %v841, %v958
      %v963 = vmul.f32 %v845, %v958
      %v964 = vmul.f32 %v849, %v958
      %v965 = vmul.f32 %v853, %v958
      %v966 = vmul.f32 %v857, %v958
      %v967 = vmul.f32 %v861, %v958
      %v968 = vmul.f32 %v865, %v958
      %v969 = vmul.f32 %v869, %v958
      %v970 = vmul.f32 %v873, %v958
      %v971 = vmul.f32 %v877, %v958
      %v972 = vmul.f32 %v881, %v958
      %v973 = vmul.f32 %v885, %v958
      %v974 = vmul.f32 %v889, %v958
      %v975 = vmul.f32 %v893, %v958
      %v976 = vmul.f32 %v897, %v958
      %v977 = vmul.f32 %v901, %v958
      %v978 = vmul.f32 %v905, %v958
      %v979 = vmul.f32 %v909, %v958
      %v980 = vmul.f32 %v913, %v958
      %v981 = vmul.f32 %v917, %v958
      %v982 = vmul.f32 %v921, %v958
      %v983 = vmul.f32 %v925, %v958
      %v984 = vmul.f32 %v929, %v958
      %v985 = vmul.f32 %v933, %v958
      %v986 = vmul.f32 %v937, %v958
      %v987 = vmul.f32 %v941, %v958
      %v988 = vmul.f32 %v945, %v958
      %v989 = vmul.f32 %v949, %v958
      %v990 = vmul.f32 %v953, %v958
      %v991 = vadd.f32 %v795, %v959
      %v992 = vadd.f32 %v796, %v960
      %v993 = vadd.f32 %v797, %v961
      %v994 = vadd.f32 %v798, %v962
      %v995 = vadd.f32 %v799, %v963
      %v996 = vadd.f32 %v800, %v964
      %v997 = vadd.f32 %v801, %v965
      %v998 = vadd.f32 %v802, %v966
      %v999 = vadd.f32 %v803, %v967
      %v1000 = vadd.f32 %v804, %v968
      %v1001 = vadd.f32 %v805, %v969
      %v1002 = vadd.f32 %v806, %v970
      %v1003 = vadd.f32 %v807, %v971
      %v1004 = vadd.f32 %v808, %v972
      %v1005 = vadd.f32 %v809, %v973
      %v1006 = vadd.f32 %v810, %v974
      %v1007 = vadd.f32 %v811, %v975
      %v1008 = vadd.f32 %v812, %v976
      %v1009 = vadd.f32 %v813, %v977
      %v1010 = vadd.f32 %v814, %v978
      %v1011 = vadd.f32 %v815, %v979
      %v1012 = vadd.f32 %v816, %v980
      %v1013 = vadd.f32 %v817, %v981
      %v1014 = vadd.f32 %v818, %v982
      %v1015 = vadd.f32 %v819, %v983
      %v1016 = vadd.f32 %v820, %v984
      %v1017 = vadd.f32 %v821, %v985
      %v1018 = vadd.f32 %v822, %v986
      %v1019 = vadd.f32 %v823, %v987
      %v1020 = vadd.f32 %v824, %v988
      %v1021 = vadd.f32 %v825, %v989
      %v1022 = vadd.f32 %v826, %v990
      %v1023 = vld [vmem:[%s2] sm:$0x1]
      %v1025 = vlaneseq
      %v1026 = vshrl.u32 %v1025, 7
      %v1027 = vsub.s32 0, %v1026
      %v1028 = vrot.slane %v1023, %v1027
      %v1030 = vadd.f32 %v991, %v1028
      %v1031 = vadd.f32 %v992, %v1028
      %v1032 = vadd.f32 %v993, %v1028
      %v1033 = vadd.f32 %v994, %v1028
      %v1034 = vadd.f32 %v995, %v1028
      %v1035 = vadd.f32 %v996, %v1028
      %v1036 = vadd.f32 %v997, %v1028
      %v1037 = vadd.f32 %v998, %v1028
      %v1038 = vadd.f32 %v999, %v1028
      %v1039 = vadd.f32 %v1000, %v1028
      %v1040 = vadd.f32 %v1001, %v1028
      %v1041 = vadd.f32 %v1002, %v1028
      %v1042 = vadd.f32 %v1003, %v1028
      %v1043 = vadd.f32 %v1004, %v1028
      %v1044 = vadd.f32 %v1005, %v1028
      %v1045 = vadd.f32 %v1006, %v1028
      %v1046 = vadd.f32 %v1007, %v1028
      %v1047 = vadd.f32 %v1008, %v1028
      %v1048 = vadd.f32 %v1009, %v1028
      %v1049 = vadd.f32 %v1010, %v1028
      %v1050 = vadd.f32 %v1011, %v1028
      %v1051 = vadd.f32 %v1012, %v1028
      %v1052 = vadd.f32 %v1013, %v1028
      %v1053 = vadd.f32 %v1014, %v1028
      %v1054 = vadd.f32 %v1015, %v1028
      %v1055 = vadd.f32 %v1016, %v1028
      %v1056 = vadd.f32 %v1017, %v1028
      %v1057 = vadd.f32 %v1018, %v1028
      %v1058 = vadd.f32 %v1019, %v1028
      %v1059 = vadd.f32 %v1020, %v1028
      %v1060 = vadd.f32 %v1021, %v1028
      %v1061 = vadd.f32 %v1022, %v1028
      %v1062 = vmax.f32 %v1030, 0.0
      %v1063 = vmax.f32 %v1031, 0.0
      %v1064 = vmax.f32 %v1032, 0.0
      %v1065 = vmax.f32 %v1033, 0.0
      %v1066 = vmax.f32 %v1034, 0.0
      %v1067 = vmax.f32 %v1035, 0.0
      %v1068 = vmax.f32 %v1036, 0.0
      %v1069 = vmax.f32 %v1037, 0.0
      %v1070 = vmax.f32 %v1038, 0.0
      %v1071 = vmax.f32 %v1039, 0.0
      %v1072 = vmax.f32 %v1040, 0.0
      %v1073 = vmax.f32 %v1041, 0.0
      %v1074 = vmax.f32 %v1042, 0.0
      %v1075 = vmax.f32 %v1043, 0.0
      %v1076 = vmax.f32 %v1044, 0.0
      %v1077 = vmax.f32 %v1045, 0.0
      %v1078 = vmax.f32 %v1046, 0.0
      %v1079 = vmax.f32 %v1047, 0.0
      %v1080 = vmax.f32 %v1048, 0.0
      %v1081 = vmax.f32 %v1049, 0.0
      %v1082 = vmax.f32 %v1050, 0.0
      %v1083 = vmax.f32 %v1051, 0.0
      %v1084 = vmax.f32 %v1052, 0.0
      %v1085 = vmax.f32 %v1053, 0.0
      %v1086 = vmax.f32 %v1054, 0.0
      %v1087 = vmax.f32 %v1055, 0.0
      %v1088 = vmax.f32 %v1056, 0.0
      %v1089 = vmax.f32 %v1057, 0.0
      %v1090 = vmax.f32 %v1058, 0.0
      %v1091 = vmax.f32 %v1059, 0.0
      %v1092 = vmax.f32 %v1060, 0.0
      %v1093 = vmax.f32 %v1061, 0.0
      %vm1094 = vcmask 130048
      %1095 = vst.msk [vmem:[%s172] sm:$0xff] %vm1094, %v1062
      %1096 = vst.msk [vmem:[%s172 + $0x8] sm:$0xff] %vm1094, %v1063
      %1097 = vst.msk [vmem:[%s172 + $0x10] sm:$0xff] %vm1094, %v1064
      %1098 = vst.msk [vmem:[%s172 + $0x18] sm:$0xff] %vm1094, %v1065
      %1099 = vst.msk [vmem:[%s172 + $0x20] sm:$0xff] %vm1094, %v1066
      %1100 = vst.msk [vmem:[%s172 + $0x28] sm:$0xff] %vm1094, %v1067
      %1101 = vst.msk [vmem:[%s172 + $0x30] sm:$0xff] %vm1094, %v1068
      %1102 = vst.msk [vmem:[%s172 + $0x38] sm:$0xff] %vm1094, %v1069
      %1103 = vst.msk [vmem:[%s172 + $0x40] sm:$0xff] %vm1094, %v1070
      %1104 = vst.msk [vmem:[%s172 + $0x48] sm:$0xff] %vm1094, %v1071
      %1105 = vst.msk [vmem:[%s172 + $0x50] sm:$0xff] %vm1094, %v1072
      %1106 = vst.msk [vmem:[%s172 + $0x58] sm:$0xff] %vm1094, %v1073
      %1107 = vst.msk [vmem:[%s172 + $0x60] sm:$0xff] %vm1094, %v1074
      %1108 = vst.msk [vmem:[%s172 + $0x68] sm:$0xff] %vm1094, %v1075
      %1109 = vst.msk [vmem:[%s172 + $0x70] sm:$0xff] %vm1094, %v1076
      %1110 = vst.msk [vmem:[%s172 + $0x78] sm:$0xff] %vm1094, %v1077
      %1111 = vst.msk [vmem:[%s172 + $0x80] sm:$0xff] %vm1094, %v1078
      %1112 = vst.msk [vmem:[%s172 + $0x88] sm:$0xff] %vm1094, %v1079
      %1113 = vst.msk [vmem:[%s172 + $0x90] sm:$0xff] %vm1094, %v1080
      %1114 = vst.msk [vmem:[%s172 + $0x98] sm:$0xff] %vm1094, %v1081
      %1115 = vst.msk [vmem:[%s172 + $0xa0] sm:$0xff] %vm1094, %v1082
      %1116 = vst.msk [vmem:[%s172 + $0xa8] sm:$0xff] %vm1094, %v1083
      %1117 = vst.msk [vmem:[%s172 + $0xb0] sm:$0xff] %vm1094, %v1084
      %1118 = vst.msk [vmem:[%s172 + $0xb8] sm:$0xff] %vm1094, %v1085
      %1119 = vst.msk [vmem:[%s172 + $0xc0] sm:$0xff] %vm1094, %v1086
      %1120 = vst.msk [vmem:[%s172 + $0xc8] sm:$0xff] %vm1094, %v1087
      %1121 = vst.msk [vmem:[%s172 + $0xd0] sm:$0xff] %vm1094, %v1088
      %1122 = vst.msk [vmem:[%s172 + $0xd8] sm:$0xff] %vm1094, %v1089
      %1123 = vst.msk [vmem:[%s172 + $0xe0] sm:$0xff] %vm1094, %v1090
      %1124 = vst.msk [vmem:[%s172 + $0xe8] sm:$0xff] %vm1094, %v1091
      %1125 = vst.msk [vmem:[%s172 + $0xf0] sm:$0xff] %vm1094, %v1092
      %1126 = vst.msk [vmem:[%s172 + $0xf8] sm:$0xff] %vm1094, %v1093
      %s1127 = smul.u32 32, %s14
      %p1128 = scmp.lt.s32.totalorder %s1127, 63
      %s1129 = scalar_select %p1128, %s1127, 63
      %s1130 = smul.addr %s1129, 8
      %s1131 = scalar_lea.vmem %s3, %s1130
      // Predicated region
      $region33: #{tpu_custom_call.1} parent=31 // pred_check
        %p1132 = pneg %p100
      $region34: #{tpu_custom_call.1} parent=31 // pred_check_branch
        %1134 = sbr.rel (%p1132) target = $region36
      $region35: #{tpu_custom_call.1} parent=31 // pred_region
        %s1135 = smul.u32 32, %s14
      $region36: #{tpu_custom_call.1} parent=31 // pred_fallthru
        _
    $region32: #{tpu_custom_call.1} parent=5 // pred_fallthru
      _
    %p1136 = scmp.le.s32.totalorder 2, %s9
    // Predicated region
    $region37: #{tpu_custom_call.1} parent=5 // pred_check
      %p1137 = pneg %p1136
    $region38: #{tpu_custom_call.1} parent=5 // pred_check_branch
      %1139 = sbr.rel (%p1137) target = $region40
    $region39: #{tpu_custom_call.1} parent=5 // pred_region
      %s1140 = ssub.s32 %s9, 2
      // Predicated region
      $region41: #{tpu_custom_call.1} parent=39 // pred_check
        %p1141 = pneg %p106
      $region42: #{tpu_custom_call.1} parent=39 // pred_check_branch
        %1143 = sbr.rel (%p1141) target = $region44
      $region43: #{tpu_custom_call.1} parent=39 // pred_region
        %s1144 = smul.u32 32, %s15
        %p1145 = scmp.lt.s32.totalorder %s1144, 63
        %s1146 = scalar_select %p1145, %s1144, 63
        %s1147 = smul.addr %s1146, 8
        %s1148 = scalar_lea.vmem %s3, %s1147
      $region44: #{tpu_custom_call.1} parent=39 // pred_fallthru
        _
    $region40: #{tpu_custom_call.1} parent=5 // pred_fallthru
      _
  $region6: #{tpu_custom_call.1} parent=0 // loop_footer
    %s13 = sadd.s32 1, %s9
  $region7: #{tpu_custom_call.1} parent=0 // loop_footer_branch
    %8 = sbr.rel target = $region3
  $region8: #{tpu_custom_call.1} parent=0 // loop_exit
    _

</llo_original>
